<compile_context>
chip_gen: v7x
topology: tpu7x:2x2x1
jax: 0.10.0
libtpu: 0.0.40
codegen_flags: <defaults>
</compile_context>

<pallas_src>
import jax
import jax.numpy as jnp
from jax.experimental import pallas as pl
from jax.experimental.pallas import tpu as pltpu


def _round_up(x, m):
    return ((x + m - 1) // m) * m


def _cdiv(a, b):
    return -(-a // b)


# Cached capability probe: does this JAX/Mosaic accept pipeline_mode=Buffered(1)
# on a pallas_call BlockSpec?  None = unknown, True/False after first attempt.
_SINGLE_BUFFER_OK = None


# ---------------------------------------------------------------------------
# Kernel body: one (TM, TN) output tile = x_tile @ w_tile + bias_tile.
# ---------------------------------------------------------------------------
def _flatten_head_kernel(x_ref, w_ref, b_ref, o_ref):
    # x_ref: (TM, nf)   w_ref: (nf, TN)   b_ref: (1, TN)   o_ref: (TM, TN)
    # Cast activations to the weight dtype *in-kernel* (VPU work, hidden under
    # the tile DMAs) rather than a separate wrapper-side pass over x in HBM.
    x = x_ref[...].astype(w_ref.dtype)
    acc = jnp.dot(x, w_ref[...], preferred_element_type=jnp.float32)
    # f32 bias add + f32 epilogue (v5e-safe: no bf16 VPU there).
    o_ref[...] = (acc + b_ref[...]).astype(o_ref.dtype)


def prepare_flatten_head_params(weight, bias, compute_dtype=jnp.bfloat16):
    """Pack nn.Linear params ONCE, outside the hot path.

    weight: [target_window, nf]  (PyTorch nn.Linear layout)
    bias:   [target_window]
    Returns:
      w_packed: [nf, Tpad]  transposed, lane-padded to a multiple of 128 and
                            cast to compute_dtype (default bf16 — the kernel is
                            HBM-bound, so halving the weight read is the single
                            biggest win); padded columns are zero.
      b_packed: [1, Tpad]   f32 (bias add stays f32); padded entries are zero.
    """
    target_window, nf = weight.shape
    t_pad = _round_up(target_window, 128)
    w_t = weight.T.astype(compute_dtype)                           # (nf, T)
    w_packed = jnp.pad(w_t, ((0, 0), (0, t_pad - target_window)))
    b_packed = jnp.pad(bias.astype(jnp.float32),
                       (0, t_pad - target_window)).reshape(1, t_pad)
    return w_packed, b_packed


def flatten_head_forward(x, w_packed, b_packed, target_window, *, tm_max=256):
    """FlattenHead forward.

    x:         [B, n_vars, d_model, patch_num]
    w_packed:  [nf, Tpad]   from prepare_flatten_head_params
    b_packed:  [1, Tpad]    from prepare_flatten_head_params
    returns    [B, n_vars, target_window]  (dtype of x)
    """
    global _SINGLE_BUFFER_OK

    B, n_vars, d_model, patch_num = x.shape
    nf = d_model * patch_num
    nf_w, t_pad = w_packed.shape
    assert nf_w == nf, (nf_w, nf)
    assert t_pad % 128 == 0 and t_pad >= target_window
    out_dtype = x.dtype
    M = B * n_vars

    # Flatten(start_dim=-2): row-major over (d_model, patch_num) == torch.
    # Contiguous reshape -> no HBM pass.  No astype / jnp.pad of x here.
    x2d = x.reshape(M, nf)

    x_isz = x2d.dtype.itemsize
    w_isz = w_packed.dtype.itemsize
    o_isz = jnp.dtype(out_dtype).itemsize

    # ---- tile selection ----------------------------------------------------
    # Row alignment follows the activation dtype's sublane packing.
    row_align = max(8, 8 * (4 // max(1, x_isz)))      # 8 rows f32, 16 rows bf16
    TM = min(tm_max, _round_up(M, row_align))
    num_m = _cdiv(M, TM)

    def vmem_bytes(tm, tn):
        # Conservative: assume the default 2-deep pipelining on every operand,
        # even if the resident weight/bias end up single-buffered (extra slack).
        return (2 * nf * tn * w_isz            # weight window(s)
                + 2 * tm * nf * x_isz          # x tiles
                + 2 * tm * tn * o_isz          # out tiles
                + 2 * tn * 4)                  # bias

    VMEM_BUDGET = 30 * 1024 * 1024
    TN, num_n, n_split = t_pad, 1, 1
    # Split the lane (t_pad) axis until (a) there are >=2 grid steps — so v7x's
    # second TensorCore has work and step j+1 DMA overlaps step j compute —
    # and (b) the schedule fits the VMEM budget.  Column tiles stay >=128.
    while TN > 128 and (num_m * num_n < 2 or vmem_bytes(TM, TN) > VMEM_BUDGET):
        n_split += 1
        TN = max(128, _round_up(_cdiv(t_pad, n_split), 128))
        num_n = _cdiv(t_pad, TN)
    # Very large nf: shrink the row tile if a single 128-lane column still
    # does not fit the budget.
    while TM > row_align and vmem_bytes(TM, TN) > VMEM_BUDGET:
        TM = max(row_align, _round_up(TM // 2, row_align))
        num_m = _cdiv(M, TM)

    vmem_limit = int(min(max(1.5 * vmem_bytes(TM, TN) + (2 << 20), 16 << 20),
                         48 << 20))

    cost = pl.CostEstimate(
        flops=2 * M * nf * t_pad,
        transcendentals=0,
        bytes_accessed=(M * nf * x_isz + nf * t_pad * w_isz
                        + t_pad * 4 + M * t_pad * o_isz))

    weight_resident = (num_n == 1)

    def run(single_buffer_resident):
        w_kw = b_kw = {}
        if single_buffer_resident:
            # Constant index_map => tile never changes; one buffer suffices.
            # Halves the dominant VMEM allocation when honoured by the runtime.
            w_kw = b_kw = dict(pipeline_mode=pl.Buffered(1))
        grid_spec = pltpu.PrefetchScalarGridSpec(
            num_scalar_prefetch=0,
            # n outer, m inner: each weight column tile is read from HBM once.
            grid=(num_n, num_m),
            in_specs=[
                pl.BlockSpec((TM, nf), lambda n, m: (m, 0)),          # x (streamed)
                pl.BlockSpec((nf, TN), lambda n, m: (0, n), **w_kw),  # weight
                pl.BlockSpec((1, TN), lambda n, m: (0, n), **b_kw),   # bias
            ],
            out_specs=pl.BlockSpec((TM, TN), lambda n, m: (m, n)),
        )
        return pl.pallas_call(
            _flatten_head_kernel,
            out_shape=jax.ShapeDtypeStruct((M, t_pad), out_dtype),
            grid_spec=grid_spec,
            compiler_params=pltpu.CompilerParams(
                dimension_semantics=("parallel", "parallel"),  # 2-TC sharding
                vmem_limit_bytes=vmem_limit),
            cost_estimate=cost,
        )(x2d, w_packed, b_packed)

    if weight_resident and _SINGLE_BUFFER_OK is not False:
        try:
            out = run(True)
            _SINGLE_BUFFER_OK = True
        except Exception:
            # pipeline_mode=Buffered(1) not supported on this JAX/Mosaic build;
            # fall back to default buffering (still correct, slightly more VMEM).
            _SINGLE_BUFFER_OK = False
            out = run(False)
    else:
        out = run(False)

    # In-kernel stores are lane-dense (multiple of 128); the padding is sliced
    # off here only when needed (no slice at all if target_window % 128 == 0).
    if t_pad != target_window:
        out = out[:, :target_window]
    # Contiguous reshape -> free.  Dropout(head_dropout=0) in eval == identity.
    # TODO(synk): training-mode dropout (head_dropout > 0) not implemented.
    return out.reshape(B, n_vars, target_window)


if __name__ == "__main__":
    # Small shapes consistent with PatchTST's FlattenHead.
    B, n_vars, d_model, patch_num = 2, 4, 16, 8
    nf = d_model * patch_num            # 128
    target_window = 24

    key = jax.random.PRNGKey(0)
    kx, kw, kb = jax.random.split(key, 3)

    x = jax.random.normal(kx, (B, n_vars, d_model, patch_num), dtype=jnp.float32)
    # Deterministic synthetic parameters (not a checkpoint load).
    weight = jax.random.normal(kw, (target_window, nf), dtype=jnp.float32) * 0.02
    bias = jax.random.normal(kb, (target_window,), dtype=jnp.float32) * 0.02

    # Reference in plain JAX (same semantics as the PyTorch module).
    ref = x.reshape(B, n_vars, nf) @ weight.T + bias

    # --- default packing: bf16 weights, in-kernel activation cast, f32 acc ---
    w_bf16, b_bf16 = prepare_flatten_head_params(weight, bias)
    out_bf16 = jax.block_until_ready(
        flatten_head_forward(x, w_bf16, b_bf16, target_window))
    assert out_bf16.shape == (B, n_vars, target_window)
    assert jnp.allclose(out_bf16, ref, atol=2e-2, rtol=2e-2), \
        float(jnp.max(jnp.abs(out_bf16 - ref)))

    # --- full-precision packing (exactness check) ---
    w_f32, b_f32 = prepare_flatten_head_params(weight, bias, jnp.float32)
    out_f32 = jax.block_until_ready(
        flatten_head_forward(x, w_f32, b_f32, target_window))
    assert out_f32.shape == (B, n_vars, target_window)
    assert jnp.allclose(out_f32, ref, atol=1e-4, rtol=1e-4)

    print("KERNEL_OK")
</pallas_src>

<mosaic_0001>
module attributes {stable_mosaic.version = 11 : i64} {
  func.func @_flatten_head_kernel(%arg0: i32, %arg1: i32, %arg2: memref<8x128xf32, #tpu.memory_space<vmem>>, %arg3: memref<128x128xbf16, #tpu.memory_space<vmem>>, %arg4: memref<1x128xf32, #tpu.memory_space<vmem>>, %arg5: memref<8x128xf32, #tpu.memory_space<vmem>>) attributes {dimension_semantics = [#tpu.dimension_semantics<parallel>, #tpu.dimension_semantics<parallel>], iteration_bounds = array<i64: 1, 1>, scalar_prefetch = 0 : i64, scratch_operands = 0 : i64, tpu.core_type = #tpu.core_type<tc>, window_params = [{transform_indices = @transform_0, window_bounds = array<i64: 8, 128>}, {pipeline_mode = #tpu.pipeline_mode<synchronous>, transform_indices = @transform_1, window_bounds = array<i64: 128, 128>}, {pipeline_mode = #tpu.pipeline_mode<synchronous>, transform_indices = @transform_2, window_bounds = array<i64: 1, 128>}, {transform_indices = @transform_3, window_bounds = array<i64: 8, 128>}]} {
    %c0 = arith.constant 0 : index
    %c0_0 = arith.constant 0 : index
    %0 = vector.load %arg2[%c0, %c0_0] : memref<8x128xf32, #tpu.memory_space<vmem>>, vector<8x128xf32>
    %1 = arith.truncf %0 : vector<8x128xf32> to vector<8x128xbf16>
    %c0_1 = arith.constant 0 : index
    %c0_2 = arith.constant 0 : index
    %2 = vector.load %arg3[%c0_1, %c0_2] : memref<128x128xbf16, #tpu.memory_space<vmem>>, vector<128x128xbf16>
    %cst = arith.constant dense<0.000000e+00> : vector<8x128xf32>
    %3 = tpu.matmul %1, %2, %cst {dimension_numbers = #tpu.dot_dimension_numbers<[1], [0], [0], [1], [0, 0, 1, 1], [], []>} : vector<8x128xbf16>, vector<128x128xbf16>, vector<8x128xf32> -> vector<8x128xf32>
    %c0_3 = arith.constant 0 : index
    %c0_4 = arith.constant 0 : index
    %4 = vector.load %arg4[%c0_3, %c0_4] : memref<1x128xf32, #tpu.memory_space<vmem>>, vector<1x128xf32>
    %5 = vector.broadcast %4 : vector<1x128xf32> to vector<8x128xf32>
    %6 = arith.addf %3, %5 : vector<8x128xf32>
    %c0_5 = arith.constant 0 : index
    %c0_6 = arith.constant 0 : index
    %7 = vector.load %arg5[%c0_5, %c0_6] : memref<8x128xf32, #tpu.memory_space<vmem>>, vector<8x128xf32>
    tpu.vector_store %arg5[%c0_5, %c0_6], %6 {strides = array<i32>} : memref<8x128xf32, #tpu.memory_space<vmem>>, vector<8x128xf32>,
    return
  }
  func.func @transform_0(%arg0: i32, %arg1: i32) -> (i32, i32) {
    %c0_i32 = arith.constant 0 : i32
    %c0_i32_0 = arith.constant 0 : i32
    return %arg1, %c0_i32 : i32, i32
  }
  func.func @transform_1(%arg0: i32, %arg1: i32) -> (i32, i32) {
    %c0_i32 = arith.constant 0 : i32
    %c0_i32_0 = arith.constant 0 : i32
    return %c0_i32, %arg0 : i32, i32
  }
  func.func @transform_2(%arg0: i32, %arg1: i32) -> (i32, i32) {
    %c0_i32 = arith.constant 0 : i32
    %c0_i32_0 = arith.constant 0 : i32
    return %c0_i32, %arg0 : i32, i32
  }
  func.func @transform_3(%arg0: i32, %arg1: i32) -> (i32, i32) {
    %c0_i32 = arith.constant 0 : i32
    return %arg1, %arg0 : i32, i32
  }
}

module attributes {stable_mosaic.version = 11 : i64} {
  func.func @_flatten_head_kernel(%arg0: i32, %arg1: i32, %arg2: memref<8x128xf32, #tpu.memory_space<vmem>>, %arg3: memref<128x128xbf16, #tpu.memory_space<vmem>>, %arg4: memref<1x128xf32, #tpu.memory_space<vmem>>, %arg5: memref<8x128xf32, #tpu.memory_space<vmem>>) attributes {dimension_semantics = [#tpu.dimension_semantics<parallel>, #tpu.dimension_semantics<parallel>], iteration_bounds = array<i64: 1, 1>, scalar_prefetch = 0 : i64, scratch_operands = 0 : i64, tpu.core_type = #tpu.core_type<tc>, window_params = [{transform_indices = @transform_0, window_bounds = array<i64: 8, 128>}, {transform_indices = @transform_1, window_bounds = array<i64: 128, 128>}, {transform_indices = @transform_2, window_bounds = array<i64: 1, 128>}, {transform_indices = @transform_3, window_bounds = array<i64: 8, 128>}]} {
    %c0 = arith.constant 0 : index
    %c0_0 = arith.constant 0 : index
    %0 = vector.load %arg2[%c0, %c0_0] : memref<8x128xf32, #tpu.memory_space<vmem>>, vector<8x128xf32>
    %1 = arith.truncf %0 : vector<8x128xf32> to vector<8x128xbf16>
    %c0_1 = arith.constant 0 : index
    %c0_2 = arith.constant 0 : index
    %2 = vector.load %arg3[%c0_1, %c0_2] : memref<128x128xbf16, #tpu.memory_space<vmem>>, vector<128x128xbf16>
    %cst = arith.constant dense<0.000000e+00> : vector<8x128xf32>
    %3 = tpu.matmul %1, %2, %cst {dimension_numbers = #tpu.dot_dimension_numbers<[1], [0], [0], [1], [0, 0, 1, 1], [], []>} : vector<8x128xbf16>, vector<128x128xbf16>, vector<8x128xf32> -> vector<8x128xf32>
    %c0_3 = arith.constant 0 : index
    %c0_4 = arith.constant 0 : index
    %4 = vector.load %arg4[%c0_3, %c0_4] : memref<1x128xf32, #tpu.memory_space<vmem>>, vector<1x128xf32>
    %5 = vector.broadcast %4 : vector<1x128xf32> to vector<8x128xf32>
    %6 = arith.addf %3, %5 : vector<8x128xf32>
    %c0_5 = arith.constant 0 : index
    %c0_6 = arith.constant 0 : index
    %7 = vector.load %arg5[%c0_5, %c0_6] : memref<8x128xf32, #tpu.memory_space<vmem>>, vector<8x128xf32>
    tpu.vector_store %arg5[%c0_5, %c0_6], %6 {strides = array<i32>} : memref<8x128xf32, #tpu.memory_space<vmem>>, vector<8x128xf32>,
    return
  }
  func.func @transform_0(%arg0: i32, %arg1: i32) -> (i32, i32) {
    %c0_i32 = arith.constant 0 : i32
    %c0_i32_0 = arith.constant 0 : i32
    return %arg1, %c0_i32 : i32, i32
  }
  func.func @transform_1(%arg0: i32, %arg1: i32) -> (i32, i32) {
    %c0_i32 = arith.constant 0 : i32
    %c0_i32_0 = arith.constant 0 : i32
    return %c0_i32, %arg0 : i32, i32
  }
  func.func @transform_2(%arg0: i32, %arg1: i32) -> (i32, i32) {
    %c0_i32 = arith.constant 0 : i32
    %c0_i32_0 = arith.constant 0 : i32
    return %c0_i32, %arg0 : i32, i32
  }
  func.func @transform_3(%arg0: i32, %arg1: i32) -> (i32, i32) {
    %c0_i32 = arith.constant 0 : i32
    return %arg1, %arg0 : i32, i32
  }
}

</mosaic_0001>

<llo_original>
// kernel: tpu_custom_call.1
$region0: #{tpu_custom_call.1}
  #allocation0 [shape = 'u32[]', space=smem, size = 0x4, offset = 0x4, fixed_abs, tag = 'smem constant byte address 0x4 - core index']
  #allocation1 [shape = 'u32[144,128]{1,0:T(1,128)}', space=vmem, size = 0x12000, scoped, tag = 'internal scratch']
  %s0 = inlined_call_operand.hbm [shape: f32[8,128], index: 0, kind: input, shape index: {}]
  %s1 = inlined_call_operand.hbm [shape: bf16[128,128], index: 1, kind: input, shape index: {}]
  %s2 = inlined_call_operand.vmem [shape: f32[1,128], index: 2, kind: input, shape index: {}]
  %s3 = inlined_call_operand.hbm [shape: f32[8,128], index: 3, kind: output, shape index: {}]
  %s4 = sld [smem:[#allocation0]]
  $region30: #{tpu_custom_call.1} parent=0
    _
  %s6 = ssub.s32 1, %s4
  %s7 = scalar_select 0, %s6, %s4
  $region1: #{tpu_custom_call.1} parent=0
    #allocation2 [shape = 'u8[4096]{0}', space=vmem, size = 0x1000, scoped, tag = 'input window, operand 0, single buffered']
    #allocation3 [shape = 's32[1]{0}', space=sflag, size = 0x4, scoped, tag = 'scoped memory for tpu_custom_call.1']
    #allocation4 [shape = 's32[1]{0}', space=sflag, size = 0x4, scoped, tag = 'scoped memory for tpu_custom_call.1']
    #allocation5 [shape = 'u8[32768]{0}', space=vmem, size = 0x8000, scoped, tag = 'input window, operand 1, single buffered']
    #allocation6 [shape = 's32[1]{0}', space=sflag, size = 0x4, scoped, tag = 'scoped memory for tpu_custom_call.1']
    #allocation7 [shape = 'u8[4096]{0}', space=vmem, size = 0x1000, scoped, tag = 'output window, operand 0, single buffered']
    %8 = vsyncpa [#allocation3], 0
    %9 = vsyncpa [#allocation6], 0
    %10 = vsyncpa [#allocation4], 0
    // Predicated region
    $region2: #{tpu_custom_call.1} parent=1 // pred_check
      _
    $region3: #{tpu_custom_call.1} parent=1 // pred_check_branch
      %12 = sbr.rel (0) target = $region5
    $region4: #{tpu_custom_call.1} parent=1 // pred_region
      %s14 = ssub.s32 128, 128
      %15 = vsyncadd [#allocation3], %s14
      %s17 = sshll.u32 [#allocation2], 4
      %s18 = int_to_ptr.vmem [resolvable:$true] %s17
      %20 = dma.hbm_to_vmem [thread:$0]  %s0, 128, %s18, [#allocation3]
    $region5: #{tpu_custom_call.1} parent=1 // pred_fallthru
      _
    // Predicated region
    $region6: #{tpu_custom_call.1} parent=1 // pred_check
      _
    $region7: #{tpu_custom_call.1} parent=1 // pred_check_branch
      %22 = sbr.rel (0) target = $region9
    $region8: #{tpu_custom_call.1} parent=1 // pred_region
      %s24 = ssub.s32 1024, 1024
      %25 = vsyncadd [#allocation6], %s24
      %s26 = sshll.u32 [#allocation5], 4
      %s27 = int_to_ptr.vmem [resolvable:$true] %s26
      %32 = dma.hbm_to_vmem [thread:$0]  %s1, 1024, %s27, [#allocation6], 64, 64, 4
    $region9: #{tpu_custom_call.1} parent=1 // pred_fallthru
      _
    // Predicated region
    $region10: #{tpu_custom_call.1} parent=1 // pred_check
      _
    $region11: #{tpu_custom_call.1} parent=1 // pred_check_branch
      %34 = sbr.rel (0) target = $region13
    $region12: #{tpu_custom_call.1} parent=1 // pred_region
      _
    $region13: #{tpu_custom_call.1} parent=1 // pred_fallthru
      _
    // Predicated region
    $region14: #{tpu_custom_call.1} parent=1 // pred_check
      _
    $region15: #{tpu_custom_call.1} parent=1 // pred_check_branch
      %36 = sbr.rel (0) target = $region17
    $region16: #{tpu_custom_call.1} parent=1 // pred_region
      %37 = dma.done [#allocation3], 128
    $region17: #{tpu_custom_call.1} parent=1 // pred_fallthru
      _
    // Predicated region
    $region18: #{tpu_custom_call.1} parent=1 // pred_check
      _
    $region19: #{tpu_custom_call.1} parent=1 // pred_check_branch
      %39 = sbr.rel (0) target = $region21
    $region20: #{tpu_custom_call.1} parent=1 // pred_region
      %40 = dma.done [#allocation6], 1024
    $region21: #{tpu_custom_call.1} parent=1 // pred_fallthru
      _
    %v42 = vld [vmem:[#allocation2] sm:$0xff]
    %v43 = vpack.c.bf16 %v42, %v42
    %v44 = vld [vmem:[#allocation5] sm:$0xf]
    %v45 = vld [vmem:[#allocation5 + $0x4] sm:$0xf]
    %v46 = vld [vmem:[#allocation5 + $0x8] sm:$0xf]
    %v47 = vld [vmem:[#allocation5 + $0xc] sm:$0xf]
    %v48 = vld [vmem:[#allocation5 + $0x10] sm:$0xf]
    %v49 = vld [vmem:[#allocation5 + $0x14] sm:$0xf]
    %v50 = vld [vmem:[#allocation5 + $0x18] sm:$0xf]
    %v51 = vld [vmem:[#allocation5 + $0x1c] sm:$0xf]
    %v52 = vld [vmem:[#allocation5 + $0x20] sm:$0xf]
    %v53 = vld [vmem:[#allocation5 + $0x24] sm:$0xf]
    %v54 = vld [vmem:[#allocation5 + $0x28] sm:$0xf]
    %v55 = vld [vmem:[#allocation5 + $0x2c] sm:$0xf]
    %v56 = vld [vmem:[#allocation5 + $0x30] sm:$0xf]
    %v57 = vld [vmem:[#allocation5 + $0x34] sm:$0xf]
    %v58 = vld [vmem:[#allocation5 + $0x38] sm:$0xf]
    %v59 = vld [vmem:[#allocation5 + $0x3c] sm:$0xf]
    %v60 = vld [vmem:[%s2] sm:$0x1]
    %v62 = vlaneseq
    %v63 = vshrl.u32 %v62, 7
    %v64 = vsub.s32 0, %v63
    %v65 = vrot.slane %v60, %v64
    %v83 = vunpack.c.l.b16 %v44
    %v84 = vunpack.c.l.b16 %v45
    %v85 = vunpack.c.l.b16 %v46
    %v86 = vunpack.c.l.b16 %v47
    %v87 = vunpack.c.l.b16 %v48
    %v88 = vunpack.c.l.b16 %v49
    %v89 = vunpack.c.l.b16 %v50
    %v90 = vunpack.c.l.b16 %v51
    %v91 = vunpack.c.l.b16 %v52
    %v92 = vunpack.c.l.b16 %v53
    %v93 = vunpack.c.l.b16 %v54
    %v94 = vunpack.c.l.b16 %v55
    %v95 = vunpack.c.l.b16 %v56
    %v96 = vunpack.c.l.b16 %v57
    %v97 = vunpack.c.l.b16 %v58
    %v98 = vunpack.c.l.b16 %v59
    %v99 = vpack.c.b16 %v84, %v83
    %v100 = vpack.c.b16 %v86, %v85
    %v101 = vpack.c.b16 %v88, %v87
    %v102 = vpack.c.b16 %v90, %v89
    %v103 = vpack.c.b16 %v92, %v91
    %v104 = vpack.c.b16 %v94, %v93
    %v105 = vpack.c.b16 %v96, %v95
    %v106 = vpack.c.b16 %v98, %v97
    %115 = vmatprep.subr.bf16.mxu0 0
    %116 = vmatpush1.bf16.msra.mxu0 %v99
    %117 = vmatprep.subr.bf16.mxu0 0
    %118 = vmatpush1.bf16.msra.mxu0 %v100
    %119 = vmatprep.subr.bf16.mxu0 0
    %120 = vmatpush1.bf16.msra.mxu0 %v101
    %121 = vmatprep.subr.bf16.mxu0 0
    %122 = vmatpush1.bf16.msra.mxu0 %v102
    %123 = vmatprep.subr.bf16.mxu0 0
    %124 = vmatpush1.bf16.msra.mxu0 %v103
    %125 = vmatprep.subr.bf16.mxu0 0
    %126 = vmatpush1.bf16.msra.mxu0 %v104
    %127 = vmatprep.subr.bf16.mxu0 0
    %128 = vmatpush1.bf16.msra.mxu0 %v105
    %129 = vmatprep.subr.bf16.mxu0 0
    %130 = vmatpush1.bf16.msra.mxu0 %v106
    %131 = vmatprep.subr.bf16.mxu0 0
    %132 = vmatpush1.bf16.msra.mxu0 0
    %133 = vmatprep.subr.bf16.mxu0 0
    %134 = vmatpush1.bf16.msra.mxu0 0
    %135 = vmatprep.subr.bf16.mxu0 0
    %136 = vmatpush1.bf16.msra.mxu0 0
    %137 = vmatprep.subr.bf16.mxu0 0
    %138 = vmatpush1.bf16.msra.mxu0 0
    %139 = vmatprep.subr.bf16.mxu0 0
    %140 = vmatpush1.bf16.msra.mxu0 0
    %141 = vmatprep.subr.bf16.mxu0 0
    %142 = vmatpush1.bf16.msra.mxu0 0
    %143 = vmatprep.subr.bf16.mxu0 0
    %144 = vmatpush1.bf16.msra.mxu0 0
    %145 = vmatprep.subr.bf16.mxu0 0
    %146 = vmatpush1.bf16.msra.mxu0 0
    %147 = vmatprep.mubr.bf16.mxu0 0
    %148 = vmatmul.mubr.bf16.gmra.mrb[0].mxu0 %v43
    %v149 = vpop.f32.mrb[0].mxu0
    %v150 = vadd.f32 %v65, %v149
    %v151 = vpop.f32.mrb[0].mxu0
    %v152 = vpop.f32.mrb[0].mxu0
    %v153 = vpop.f32.mrb[0].mxu0
    %154 = vdwg.mxu0
    %155 = vst [vmem:[#allocation7] sm:$0xff] %v150
    // Predicated region
    $region22: #{tpu_custom_call.1} parent=1 // pred_check
      _
    $region23: #{tpu_custom_call.1} parent=1 // pred_check_branch
      %157 = sbr.rel (0) target = $region25
    $region24: #{tpu_custom_call.1} parent=1 // pred_region
      %s159 = ssub.s32 128, 128
      %160 = vsyncadd [#allocation4], %s159
      %s162 = sshll.u32 [#allocation7], 4
      %s163 = int_to_ptr.vmem [resolvable:$true] %s162
      %165 = dma.vmem_to_hbm [thread:$0]  %s163, 128, %s3, [#allocation4]
    $region25: #{tpu_custom_call.1} parent=1 // pred_fallthru
      _
    // Predicated region
    $region26: #{tpu_custom_call.1} parent=1 // pred_check
      _
    $region27: #{tpu_custom_call.1} parent=1 // pred_check_branch
      %167 = sbr.rel (0) target = $region29
    $region28: #{tpu_custom_call.1} parent=1 // pred_region
      %168 = dma.done [#allocation4], 128
    $region29: #{tpu_custom_call.1} parent=1 // pred_fallthru
      _
    %169 = vsyncpa [#allocation3], 1
    %170 = vsyncpa [#allocation6], 1
    %171 = vsyncpa [#allocation4], 1

// kernel: tpu_custom_call.1
$region0: #{tpu_custom_call.1}
  #allocation0 [shape = 'u32[]', space=smem, size = 0x4, offset = 0x4, fixed_abs, tag = 'smem constant byte address 0x4 - core index']
  #allocation1 [shape = 'u32[144,128]{1,0:T(1,128)}', space=vmem, size = 0x12000, scoped, tag = 'internal scratch']
  %s0 = inlined_call_operand.hbm [shape: f32[8,128], index: 0, kind: input, shape index: {}]
  %s1 = inlined_call_operand.hbm [shape: bf16[128,128], index: 1, kind: input, shape index: {}]
  %s2 = inlined_call_operand.vmem [shape: f32[1,128], index: 2, kind: input, shape index: {}]
  %s3 = inlined_call_operand.hbm [shape: f32[8,128], index: 3, kind: output, shape index: {}]
  %s4 = sld [smem:[#allocation0]]
  $region30: #{tpu_custom_call.1} parent=0
    _
  %s6 = ssub.s32 1, %s4
  %s7 = scalar_select 0, %s6, %s4
  $region1: #{tpu_custom_call.1} parent=0
    #allocation2 [shape = 'u8[4096]{0}', space=vmem, size = 0x1000, scoped, tag = 'input window, operand 0, single buffered']
    #allocation3 [shape = 's32[1]{0}', space=sflag, size = 0x4, scoped, tag = 'scoped memory for tpu_custom_call.1']
    #allocation4 [shape = 's32[1]{0}', space=sflag, size = 0x4, scoped, tag = 'scoped memory for tpu_custom_call.1']
    #allocation5 [shape = 'u8[32768]{0}', space=vmem, size = 0x8000, scoped, tag = 'input window, operand 1, single buffered']
    #allocation6 [shape = 's32[1]{0}', space=sflag, size = 0x4, scoped, tag = 'scoped memory for tpu_custom_call.1']
    #allocation7 [shape = 'u8[4096]{0}', space=vmem, size = 0x1000, scoped, tag = 'output window, operand 0, single buffered']
    %8 = vsyncpa [#allocation3], 0
    %9 = vsyncpa [#allocation6], 0
    %10 = vsyncpa [#allocation4], 0
    // Predicated region
    $region2: #{tpu_custom_call.1} parent=1 // pred_check
      _
    $region3: #{tpu_custom_call.1} parent=1 // pred_check_branch
      %12 = sbr.rel (0) target = $region5
    $region4: #{tpu_custom_call.1} parent=1 // pred_region
      %s14 = ssub.s32 128, 128
      %15 = vsyncadd [#allocation3], %s14
      %s17 = sshll.u32 [#allocation2], 4
      %s18 = int_to_ptr.vmem [resolvable:$true] %s17
      %20 = dma.hbm_to_vmem [thread:$0]  %s0, 128, %s18, [#allocation3]
    $region5: #{tpu_custom_call.1} parent=1 // pred_fallthru
      _
    // Predicated region
    $region6: #{tpu_custom_call.1} parent=1 // pred_check
      _
    $region7: #{tpu_custom_call.1} parent=1 // pred_check_branch
      %22 = sbr.rel (0) target = $region9
    $region8: #{tpu_custom_call.1} parent=1 // pred_region
      %s24 = ssub.s32 1024, 1024
      %25 = vsyncadd [#allocation6], %s24
      %s26 = sshll.u32 [#allocation5], 4
      %s27 = int_to_ptr.vmem [resolvable:$true] %s26
      %32 = dma.hbm_to_vmem [thread:$0]  %s1, 1024, %s27, [#allocation6], 64, 64, 4
    $region9: #{tpu_custom_call.1} parent=1 // pred_fallthru
      _
    // Predicated region
    $region10: #{tpu_custom_call.1} parent=1 // pred_check
      _
    $region11: #{tpu_custom_call.1} parent=1 // pred_check_branch
      %34 = sbr.rel (0) target = $region13
    $region12: #{tpu_custom_call.1} parent=1 // pred_region
      _
    $region13: #{tpu_custom_call.1} parent=1 // pred_fallthru
      _
    // Predicated region
    $region14: #{tpu_custom_call.1} parent=1 // pred_check
      _
    $region15: #{tpu_custom_call.1} parent=1 // pred_check_branch
      %36 = sbr.rel (0) target = $region17
    $region16: #{tpu_custom_call.1} parent=1 // pred_region
      %37 = dma.done [#allocation3], 128
    $region17: #{tpu_custom_call.1} parent=1 // pred_fallthru
      _
    // Predicated region
    $region18: #{tpu_custom_call.1} parent=1 // pred_check
      _
    $region19: #{tpu_custom_call.1} parent=1 // pred_check_branch
      %39 = sbr.rel (0) target = $region21
    $region20: #{tpu_custom_call.1} parent=1 // pred_region
      %40 = dma.done [#allocation6], 1024
    $region21: #{tpu_custom_call.1} parent=1 // pred_fallthru
      _
    %v42 = vld [vmem:[#allocation2] sm:$0xff]
    %v43 = vpack.c.bf16 %v42, %v42
    %v44 = vld [vmem:[#allocation5] sm:$0xf]
    %v45 = vld [vmem:[#allocation5 + $0x4] sm:$0xf]
    %v46 = vld [vmem:[#allocation5 + $0x8] sm:$0xf]
    %v47 = vld [vmem:[#allocation5 + $0xc] sm:$0xf]
    %v48 = vld [vmem:[#allocation5 + $0x10] sm:$0xf]
    %v49 = vld [vmem:[#allocation5 + $0x14] sm:$0xf]
    %v50 = vld [vmem:[#allocation5 + $0x18] sm:$0xf]
    %v51 = vld [vmem:[#allocation5 + $0x1c] sm:$0xf]
    %v52 = vld [vmem:[#allocation5 + $0x20] sm:$0xf]
    %v53 = vld [vmem:[#allocation5 + $0x24] sm:$0xf]
    %v54 = vld [vmem:[#allocation5 + $0x28] sm:$0xf]
    %v55 = vld [vmem:[#allocation5 + $0x2c] sm:$0xf]
    %v56 = vld [vmem:[#allocation5 + $0x30] sm:$0xf]
    %v57 = vld [vmem:[#allocation5 + $0x34] sm:$0xf]
    %v58 = vld [vmem:[#allocation5 + $0x38] sm:$0xf]
    %v59 = vld [vmem:[#allocation5 + $0x3c] sm:$0xf]
    %v60 = vld [vmem:[%s2] sm:$0x1]
    %v62 = vlaneseq
    %v63 = vshrl.u32 %v62, 7
    %v64 = vsub.s32 0, %v63
    %v65 = vrot.slane %v60, %v64
    %v83 = vunpack.c.l.b16 %v44
    %v84 = vunpack.c.l.b16 %v45
    %v85 = vunpack.c.l.b16 %v46
    %v86 = vunpack.c.l.b16 %v47
    %v87 = vunpack.c.l.b16 %v48
    %v88 = vunpack.c.l.b16 %v49
    %v89 = vunpack.c.l.b16 %v50
    %v90 = vunpack.c.l.b16 %v51
    %v91 = vunpack.c.l.b16 %v52
    %v92 = vunpack.c.l.b16 %v53
    %v93 = vunpack.c.l.b16 %v54
    %v94 = vunpack.c.l.b16 %v55
    %v95 = vunpack.c.l.b16 %v56
    %v96 = vunpack.c.l.b16 %v57
    %v97 = vunpack.c.l.b16 %v58
    %v98 = vunpack.c.l.b16 %v59
    %v99 = vpack.c.b16 %v84, %v83
    %v100 = vpack.c.b16 %v86, %v85
    %v101 = vpack.c.b16 %v88, %v87
    %v102 = vpack.c.b16 %v90, %v89
    %v103 = vpack.c.b16 %v92, %v91
    %v104 = vpack.c.b16 %v94, %v93
    %v105 = vpack.c.b16 %v96, %v95
    %v106 = vpack.c.b16 %v98, %v97
    %115 = vmatprep.subr.bf16.mxu0 0
    %116 = vmatpush1.bf16.msra.mxu0 %v99
    %117 = vmatprep.subr.bf16.mxu0 0
    %118 = vmatpush1.bf16.msra.mxu0 %v100
    %119 = vmatprep.subr.bf16.mxu0 0
    %120 = vmatpush1.bf16.msra.mxu0 %v101
    %121 = vmatprep.subr.bf16.mxu0 0
    %122 = vmatpush1.bf16.msra.mxu0 %v102
    %123 = vmatprep.subr.bf16.mxu0 0
    %124 = vmatpush1.bf16.msra.mxu0 %v103
    %125 = vmatprep.subr.bf16.mxu0 0
    %126 = vmatpush1.bf16.msra.mxu0 %v104
    %127 = vmatprep.subr.bf16.mxu0 0
    %128 = vmatpush1.bf16.msra.mxu0 %v105
    %129 = vmatprep.subr.bf16.mxu0 0
    %130 = vmatpush1.bf16.msra.mxu0 %v106
    %131 = vmatprep.subr.bf16.mxu0 0
    %132 = vmatpush1.bf16.msra.mxu0 0
    %133 = vmatprep.subr.bf16.mxu0 0
    %134 = vmatpush1.bf16.msra.mxu0 0
    %135 = vmatprep.subr.bf16.mxu0 0
    %136 = vmatpush1.bf16.msra.mxu0 0
    %137 = vmatprep.subr.bf16.mxu0 0
    %138 = vmatpush1.bf16.msra.mxu0 0
    %139 = vmatprep.subr.bf16.mxu0 0
    %140 = vmatpush1.bf16.msra.mxu0 0
    %141 = vmatprep.subr.bf16.mxu0 0
    %142 = vmatpush1.bf16.msra.mxu0 0
    %143 = vmatprep.subr.bf16.mxu0 0
    %144 = vmatpush1.bf16.msra.mxu0 0
    %145 = vmatprep.subr.bf16.mxu0 0
    %146 = vmatpush1.bf16.msra.mxu0 0
    %147 = vmatprep.mubr.bf16.mxu0 0
    %148 = vmatmul.mubr.bf16.gmra.mrb[0].mxu0 %v43
    %v149 = vpop.f32.mrb[0].mxu0
    %v150 = vadd.f32 %v65, %v149
    %v151 = vpop.f32.mrb[0].mxu0
    %v152 = vpop.f32.mrb[0].mxu0
    %v153 = vpop.f32.mrb[0].mxu0
    %154 = vdwg.mxu0
    %155 = vst [vmem:[#allocation7] sm:$0xff] %v150
    // Predicated region
    $region22: #{tpu_custom_call.1} parent=1 // pred_check
      _
    $region23: #{tpu_custom_call.1} parent=1 // pred_check_branch
      %157 = sbr.rel (0) target = $region25
    $region24: #{tpu_custom_call.1} parent=1 // pred_region
      %s159 = ssub.s32 128, 128
      %160 = vsyncadd [#allocation4], %s159
      %s162 = sshll.u32 [#allocation7], 4
      %s163 = int_to_ptr.vmem [resolvable:$true] %s162
      %165 = dma.vmem_to_hbm [thread:$0]  %s163, 128, %s3, [#allocation4]
    $region25: #{tpu_custom_call.1} parent=1 // pred_fallthru
      _
    // Predicated region
    $region26: #{tpu_custom_call.1} parent=1 // pred_check
      _
    $region27: #{tpu_custom_call.1} parent=1 // pred_check_branch
      %167 = sbr.rel (0) target = $region29
    $region28: #{tpu_custom_call.1} parent=1 // pred_region
      %168 = dma.done [#allocation4], 128
    $region29: #{tpu_custom_call.1} parent=1 // pred_fallthru
      _
    %169 = vsyncpa [#allocation3], 1
    %170 = vsyncpa [#allocation6], 1
    %171 = vsyncpa [#allocation4], 1

</llo_original>
